<compile_context>
chip_gen: v7x
topology: tpu7x:2x2x1
jax: 0.10.0
libtpu: 0.0.40
codegen_flags: <defaults>
</compile_context>

<pallas_src>
import functools
import math

import jax
import jax.numpy as jnp
from jax.experimental import pallas as pl
from jax.experimental.pallas import tpu as pltpu


MAX_SEQ_LEN = 5000


# ----------------------------------------------------------------------------
# pe buffer construction (exactly mirrors the PyTorch __init__)
# ----------------------------------------------------------------------------
def make_sinusoidal_pe(max_seq_len: int, nemd: int) -> jnp.ndarray:
    """Builds the (max_seq_len, 1, nemd) buffer exactly as the PyTorch module."""
    assert nemd % 2 == 0, "nemd must be even (same restriction as the torch code)"
    position = jnp.arange(max_seq_len, dtype=jnp.float32)[:, None]          # (L, 1)
    div_term = jnp.exp(
        -math.log(10000.0) * jnp.arange(0, nemd, 2, dtype=jnp.float32) / nemd
    )                                                                        # (E/2,)
    ang = position * div_term                                                # (L, E/2)
    pe = jnp.zeros((max_seq_len, nemd), jnp.float32)
    pe = pe.at[:, 0::2].set(jnp.sin(ang))
    pe = pe.at[:, 1::2].set(jnp.cos(ang))
    return pe[:, None, :]                                                    # (L, 1, E)


# ----------------------------------------------------------------------------
# Kernel: lane-dense broadcast add
#   x_ref  : (t_tile, B*E)  in x.dtype
#   pe_ref : (t_tile, E)    in f32
#   out    : (t_tile, B*E)  in x.dtype
# ----------------------------------------------------------------------------
def _add_pe_kernel(x_ref, pe_ref, out_ref, *, batch):
    pe = pe_ref[...].astype(jnp.float32)                       # (t_tile, E)
    if batch > 1:
        # Replicate pe B times along lanes to match the flattened (B*E) layout.
        pe = jnp.concatenate([pe] * batch, axis=-1)            # (t_tile, B*E)
    out_ref[...] = (x_ref[...].astype(jnp.float32) + pe).astype(out_ref.dtype)


def _choose_seq_tile(T, B, E, itemsize, vmem_budget_bytes=3 << 20):
    """Largest seq tile whose x block stays under ~3 MiB, so double-buffered
    (x + out + pe) fits v5e's 16 MiB scoped-VMEM default; also capped so the
    'parallel' seq axis has >=2 grid steps for v7x's two TensorCores."""
    sub = {4: 8, 2: 16, 1: 32}.get(itemsize, 8)               # sublane multiple
    rows = max(1, vmem_budget_bytes // max(1, B * E * itemsize))
    t_tile = min(T, rows)
    if T >= 2 * sub:                                           # allow TC split
        t_tile = min(t_tile, pl.cdiv(T, 2))
    if t_tile >= sub:                                          # keep vregs packed
        t_tile -= t_tile % sub
    return max(1, t_tile)


# ----------------------------------------------------------------------------
# Wrapper
# ----------------------------------------------------------------------------
def positional_encoding_forward(x, pe):
    """x: (T, B, E); pe: (max_seq_len, 1, E). Returns x + pe[:T] (broadcast over B)."""
    T, B, E = x.shape
    assert pe.shape[0] >= T and pe.shape[-1] == E

    x2 = x.reshape(T, B * E)                                   # lane-dense view
    pe2 = pe.reshape(pe.shape[0], E)[:T].astype(jnp.float32)   # only the T rows used

    t_tile = _choose_seq_tile(T, B, E, x.dtype.itemsize)
    grid = (pl.cdiv(T, t_tile),)

    out = pl.pallas_call(
        functools.partial(_add_pe_kernel, batch=B),
        out_shape=jax.ShapeDtypeStruct((T, B * E), x.dtype),
        grid=grid,
        in_specs=[
            pl.BlockSpec((t_tile, B * E), lambda i: (i, 0)),   # x tile (lane-dense)
            pl.BlockSpec((t_tile, E), lambda i: (i, 0)),       # matching pe rows
        ],
        out_specs=pl.BlockSpec((t_tile, B * E), lambda i: (i, 0)),
        input_output_aliases={0: 0},                           # out reuses x's buffer
        compiler_params=pltpu.CompilerParams(
            dimension_semantics=("parallel",)),
    )(x2, pe2)
    return out.reshape(T, B, E)


# ----------------------------------------------------------------------------
if __name__ == "__main__":
    NEMD = 32            # config.model.transformer.nemd
    T, B = 8, 2          # seq-major (T, B, nemd), matching batch_first=False

    key = jax.random.PRNGKey(0)
    x = jax.random.normal(key, (T, B, NEMD), dtype=jnp.float32)
    pe = make_sinusoidal_pe(MAX_SEQ_LEN, NEMD)

    # Reference (plain-JAX equivalent of the PyTorch forward) -- computed
    # before the kernel call because x is donated below.
    ref = x + pe[:T]

    fwd = jax.jit(positional_encoding_forward, donate_argnums=(0,))
    out = fwd(x, pe)
    jax.block_until_ready(out)

    assert out.shape == (T, B, NEMD)
    assert jnp.allclose(out, ref, atol=1e-6, rtol=1e-6)

    print("KERNEL_OK")
</pallas_src>

<mosaic_0001>
module attributes {stable_mosaic.version = 11 : i64} {
  func.func @_add_pe_kernel(%arg0: i32, %arg1: memref<8x64xf32, #tpu.memory_space<vmem>>, %arg2: memref<8x32xf32, #tpu.memory_space<vmem>>, %arg3: memref<8x64xf32, #tpu.memory_space<vmem>>) attributes {dimension_semantics = [#tpu.dimension_semantics<parallel>], iteration_bounds = array<i64: 1>, scalar_prefetch = 0 : i64, scratch_operands = 0 : i64, tpu.core_type = #tpu.core_type<tc>, window_params = [{transform_indices = @transform_0, window_bounds = array<i64: 8, 64>}, {transform_indices = @transform_1, window_bounds = array<i64: 8, 32>}, {transform_indices = @transform_2, window_bounds = array<i64: 8, 64>}]} {
    %c0 = arith.constant 0 : index
    %c0_0 = arith.constant 0 : index
    %0 = vector.load %arg2[%c0, %c0_0] : memref<8x32xf32, #tpu.memory_space<vmem>>, vector<8x32xf32>
    %1 = tpu.concatenate %0, %0 in 1 : vector<8x32xf32>, vector<8x32xf32> -> vector<8x64xf32>
    %c0_1 = arith.constant 0 : index
    %c0_2 = arith.constant 0 : index
    %2 = vector.load %arg1[%c0_1, %c0_2] : memref<8x64xf32, #tpu.memory_space<vmem>>, vector<8x64xf32>
    %3 = arith.addf %2, %1 : vector<8x64xf32>
    %c0_3 = arith.constant 0 : index
    %c0_4 = arith.constant 0 : index
    %4 = vector.load %arg3[%c0_3, %c0_4] : memref<8x64xf32, #tpu.memory_space<vmem>>, vector<8x64xf32>
    tpu.vector_store %arg3[%c0_3, %c0_4], %3 {strides = array<i32>} : memref<8x64xf32, #tpu.memory_space<vmem>>, vector<8x64xf32>,
    return
  }
  func.func @transform_0(%arg0: i32) -> (i32, i32) {
    %c0_i32 = arith.constant 0 : i32
    %c0_i32_0 = arith.constant 0 : i32
    return %arg0, %c0_i32 : i32, i32
  }
  func.func @transform_1(%arg0: i32) -> (i32, i32) {
    %c0_i32 = arith.constant 0 : i32
    %c0_i32_0 = arith.constant 0 : i32
    return %arg0, %c0_i32 : i32, i32
  }
  func.func @transform_2(%arg0: i32) -> (i32, i32) {
    %c0_i32 = arith.constant 0 : i32
    %c0_i32_0 = arith.constant 0 : i32
    return %arg0, %c0_i32 : i32, i32
  }
}

</mosaic_0001>

<llo_original>
// kernel: positional_encoding_forward.1
$region0: #{positional_encoding_forward.1}
  #allocation0 [shape = 'u32[]', space=smem, size = 0x4, offset = 0x4, fixed_abs, tag = 'smem constant byte address 0x4 - core index']
  #allocation1 [shape = 'u32[144,128]{1,0:T(1,128)}', space=vmem, size = 0x12000, scoped, tag = 'internal scratch']
  %s0 = inlined_call_operand.vmem [shape: f32[8,64], index: 0, kind: input, shape index: {}, may-alias: {0,2}]
  %s1 = inlined_call_operand.vmem [shape: f32[8,32], index: 1, kind: input, shape index: {}]
  %s2 = inlined_call_operand.vmem [shape: f32[8,64], index: 2, kind: output, shape index: {}, may-alias: {0,2}]
  %s3 = sld [smem:[#allocation0]]
  $region18: #{positional_encoding_forward.1} parent=0
    _
  %s5 = ssub.s32 1, %s3
  %s6 = scalar_select 0, %s5, %s3
  // Predicated region
  $region2: #{positional_encoding_forward.1} parent=0 // pred_check
    _
  $region3: #{positional_encoding_forward.1} parent=0 // pred_check_branch
    %8 = sbr.rel (0) target = $region5
  $region4: #{positional_encoding_forward.1} parent=0 // pred_region
    _
  $region5: #{positional_encoding_forward.1} parent=0 // pred_fallthru
    _
  // Predicated region
  $region6: #{positional_encoding_forward.1} parent=0 // pred_check
    _
  $region7: #{positional_encoding_forward.1} parent=0 // pred_check_branch
    %10 = sbr.rel (0) target = $region9
  $region8: #{positional_encoding_forward.1} parent=0 // pred_region
    _
  $region9: #{positional_encoding_forward.1} parent=0 // pred_fallthru
    _
  %v11 = vld [vmem:[%s1] sm:$0xff]
  %13 = vrot.lane.b32.xlu0 %v11, 32
  %v14 = vpop.permute.xlu0 %13
  %vm16 = vcmask 261120
  %v17 = vsel %vm16, %v11, %v14
  %v18 = vld [vmem:[%s0] sm:$0xff]
  %v19 = vadd.f32 %v18, %v17
  %vm20 = vcmask 523264
  %21 = vst.msk [vmem:[%s2] sm:$0xff] %vm20, %v19
  // Predicated region
  $region10: #{positional_encoding_forward.1} parent=0 // pred_check
    _
  $region11: #{positional_encoding_forward.1} parent=0 // pred_check_branch
    %23 = sbr.rel (0) target = $region13
  $region12: #{positional_encoding_forward.1} parent=0 // pred_region
    _
  $region13: #{positional_encoding_forward.1} parent=0 // pred_fallthru
    _
  // Predicated region
  $region14: #{positional_encoding_forward.1} parent=0 // pred_check
    _
  $region15: #{positional_encoding_forward.1} parent=0 // pred_check_branch
    %25 = sbr.rel (0) target = $region17
  $region16: #{positional_encoding_forward.1} parent=0 // pred_region
    _
  $region17: #{positional_encoding_forward.1} parent=0 // pred_fallthru
    _

</llo_original>
